<compile_context>
chip_gen: v7x
topology: tpu7x:2x2x1
jax: 0.10.0
libtpu: 0.0.40
codegen_flags: <defaults>
</compile_context>

<pallas_src>
import jax
import jax.numpy as jnp
from jax.experimental import pallas as pl
from jax.experimental.pallas import tpu as pltpu


_C = 1024                                   # lane width per row (multiple of 128)
_TARGET_BLOCK_BYTES = 4 * 1024 * 1024       # ~4 MiB f32 per block
_TARGET_BLOCK_ROWS = _TARGET_BLOCK_BYTES // (_C * 4)   # 1024 rows
_MIN_PALLAS_ELEMS = 64 * 1024               # below this, fused XLA a*x+b wins


def _linear_kernel(ab_ref, x_ref, o_ref):
    # ab_ref: (2,) f32 scalars in SMEM ([a, b]); x_ref/o_ref: (block_rows, 1024) f32 in VMEM
    a = ab_ref[0]
    b = ab_ref[1]
    o_ref[...] = a * x_ref[...] + b


def _select_block_rows(rows):
    """Pick a block height: multiple of 8 (or == rows), ~4 MiB, grid >= 2 when possible."""
    if rows < 16:
        return rows                          # single block; block dim == full dim is legal
    half = (rows // 2) // 8 * 8              # multiple of 8, keeps at least 2 blocks
    return min(_TARGET_BLOCK_ROWS, max(8, half))


def _linear_pallas_2d(a, b, x2d):
    """y2d = a * x2d + b on a (rows, _C) f32 slab via a row-blocked Pallas kernel."""
    rows, cols = x2d.shape                   # cols == _C, a multiple of 128
    ab = jnp.stack([a, b]).astype(jnp.float32)

    block_rows = _select_block_rows(rows)
    grid = (pl.cdiv(rows, block_rows),)      # partial last row-block handled by Pallas

    block_bytes = block_rows * cols * 4
    # double-buffered input + output (~4x block) plus headroom; explicit because
    # v5e's default scoped VMEM is only 16 MiB.
    vmem_limit = max(16 * 1024 * 1024, 5 * block_bytes)

    return pl.pallas_call(
        _linear_kernel,
        out_shape=jax.ShapeDtypeStruct((rows, cols), jnp.float32),
        grid=grid,
        in_specs=[
            pl.BlockSpec(memory_space=pltpu.MemorySpace.SMEM),       # [a, b]
            pl.BlockSpec((block_rows, cols), lambda i: (i, 0)),      # contiguous row block
        ],
        out_specs=pl.BlockSpec((block_rows, cols), lambda i: (i, 0)),
        compiler_params=pltpu.CompilerParams(
            dimension_semantics=("parallel",),
            vmem_limit_bytes=vmem_limit,
        ),
        cost_estimate=pl.CostEstimate(
            flops=2 * rows * cols,
            transcendentals=0,
            bytes_accessed=2 * rows * cols * 4,
        ),
    )(ab, x2d)


def linear_forward(a, b, x, *, force_pallas=False):
    """y = a * x + b.

    a, b: scalar float32 parameters (shape ()).
    x   : float32 array of shape (N,).
    force_pallas: route even tiny inputs through the Pallas kernel (for testing).
    """
    x = x.astype(jnp.float32)
    a = jnp.asarray(a, jnp.float32)
    b = jnp.asarray(b, jnp.float32)
    n = x.shape[0]

    # Empty input / small-N fast path: the fused XLA expression is strictly
    # faster than kernel launch overhead for tiny arrays.
    if n == 0 or (n < _MIN_PALLAS_ELEMS and not force_pallas):
        return a * x + b

    n_bulk = (n // _C) * _C

    if n_bulk == n:
        # Whole array is a free (rows, _C) view of the contiguous buffer.
        y2d = _linear_pallas_2d(a, b, x.reshape(n // _C, _C))
        return y2d.reshape(n)

    if n_bulk == 0:
        # Only reachable with force_pallas on a tiny input: pad just these
        # < _C elements into one (1, _C) row (negligible copy).
        y2d = _linear_pallas_2d(a, b, jnp.pad(x, (0, _C - n)).reshape(1, _C))
        return y2d.reshape(_C)[:n]

    # Divisible bulk through the kernel, sub-1024-element tail via XLA.
    y_bulk = _linear_pallas_2d(a, b, x[:n_bulk].reshape(n_bulk // _C, _C)).reshape(n_bulk)
    y_tail = a * x[n_bulk:] + b
    return jnp.concatenate([y_bulk, y_tail])


if __name__ == "__main__":
    # Deterministic input matching the PyTorch script:
    # x_origin = linspace(100, 300, 200); x = (x_origin - mean) / std (unbiased)
    x_origin = jnp.linspace(100.0, 300.0, 200, dtype=jnp.float32)
    x_small = (x_origin - jnp.mean(x_origin)) / jnp.std(x_origin, ddof=1)

    # Parameters: zeros (as in Linear.__init__) and a nonzero pair from PRNGKey(0).
    a0 = jnp.zeros((), dtype=jnp.float32)
    b0 = jnp.zeros((), dtype=jnp.float32)
    key = jax.random.PRNGKey(0)
    ka, kb, kx = jax.random.split(key, 3)
    a1 = jax.random.normal(ka, (), dtype=jnp.float32)
    b1 = jax.random.normal(kb, (), dtype=jnp.float32)

    # 1) Literal module workload (n=200), forced through the Pallas kernel.
    y0 = linear_forward(a0, b0, x_small, force_pallas=True)
    y1 = linear_forward(a1, b1, x_small, force_pallas=True)
    jax.block_until_ready((y0, y1))
    assert y0.shape == x_small.shape and y1.shape == x_small.shape
    assert jnp.allclose(y0, a0 * x_small + b0, atol=1e-6), "mismatch (zero params)"
    assert jnp.allclose(y1, a1 * x_small + b1, atol=1e-6), "mismatch (nonzero params)"

    # 2) Small-N XLA fast path (default behavior for n=200).
    y_fast = linear_forward(a1, b1, x_small)
    jax.block_until_ready(y_fast)
    assert jnp.allclose(y_fast, a1 * x_small + b1, atol=1e-6), "mismatch (fast path)"

    # 3) Divisible case: free reshape view, >=2 row blocks (both v7x TCs busy).
    x_div = jax.random.normal(kx, (16 * 1024,), dtype=jnp.float32)
    y_div = linear_forward(a1, b1, x_div, force_pallas=True)
    jax.block_until_ready(y_div)
    assert jnp.allclose(y_div, a1 * x_div + b1, atol=1e-5), "mismatch (divisible bulk)"

    # 4) Non-divisible case: kernel bulk + XLA tail.
    x_nd = x_div[: 16 * 1024 - 37]
    y_nd = linear_forward(a1, b1, x_nd, force_pallas=True)
    jax.block_until_ready(y_nd)
    assert jnp.allclose(y_nd, a1 * x_nd + b1, atol=1e-5), "mismatch (bulk + tail)"

    print("KERNEL_OK")
</pallas_src>

<mosaic_0001>
module attributes {stable_mosaic.version = 11 : i64} {
  func.func @_linear_kernel(%arg0: i32, %arg1: memref<2xf32, #tpu.memory_space<smem>>, %arg2: memref<1x1024xf32, #tpu.memory_space<vmem>>, %arg3: memref<1x1024xf32, #tpu.memory_space<vmem>>) attributes {dimension_semantics = [#tpu.dimension_semantics<parallel>], iteration_bounds = array<i64: 1>, scalar_prefetch = 0 : i64, scratch_operands = 0 : i64, tpu.core_type = #tpu.core_type<tc>, window_params = [{transform_indices = @transform_0, window_bounds = array<i64: 2>}, {transform_indices = @transform_1, window_bounds = array<i64: 1, 1024>}, {transform_indices = @transform_2, window_bounds = array<i64: 1, 1024>}]} {
    %c0 = arith.constant 0 : index
    %0 = memref.load %arg1[%c0] : memref<2xf32, #tpu.memory_space<smem>>
    %c1 = arith.constant 1 : index
    %1 = memref.load %arg1[%c1] : memref<2xf32, #tpu.memory_space<smem>>
    %c0_0 = arith.constant 0 : index
    %c0_1 = arith.constant 0 : index
    %2 = vector.load %arg2[%c0_0, %c0_1] : memref<1x1024xf32, #tpu.memory_space<vmem>>, vector<1x1024xf32>
    %3 = vector.broadcast %0 : f32 to vector<1x1024xf32>
    %4 = arith.mulf %3, %2 : vector<1x1024xf32>
    %5 = vector.broadcast %1 : f32 to vector<1x1024xf32>
    %6 = arith.addf %4, %5 : vector<1x1024xf32>
    %c0_2 = arith.constant 0 : index
    %c0_3 = arith.constant 0 : index
    %7 = vector.load %arg3[%c0_2, %c0_3] : memref<1x1024xf32, #tpu.memory_space<vmem>>, vector<1x1024xf32>
    tpu.vector_store %arg3[%c0_2, %c0_3], %6 {strides = array<i32>} : memref<1x1024xf32, #tpu.memory_space<vmem>>, vector<1x1024xf32>,
    return
  }
  func.func @transform_0(%arg0: i32) -> i32 {
    %c0_i32 = arith.constant 0 : i32
    %c0_i32_0 = arith.constant 0 : i32
    return %c0_i32 : i32
  }
  func.func @transform_1(%arg0: i32) -> (i32, i32) {
    %c0_i32 = arith.constant 0 : i32
    %c0_i32_0 = arith.constant 0 : i32
    return %arg0, %c0_i32 : i32, i32
  }
  func.func @transform_2(%arg0: i32) -> (i32, i32) {
    %c0_i32 = arith.constant 0 : i32
    %c0_i32_0 = arith.constant 0 : i32
    return %arg0, %c0_i32 : i32, i32
  }
}

</mosaic_0001>

<llo_original>
// kernel: tpu_custom_call.1
$region0: #{tpu_custom_call.1}
  #allocation0 [shape = 'u32[]', space=smem, size = 0x4, offset = 0x4, fixed_abs, tag = 'smem constant byte address 0x4 - core index']
  #allocation1 [shape = 'u32[144,128]{1,0:T(1,128)}', space=vmem, size = 0x12000, scoped, tag = 'internal scratch']
  %s0 = inlined_call_operand.hbm [shape: f32[2], index: 0, kind: input, shape index: {}]
  %s1 = inlined_call_operand.hbm [shape: f32[1,1024], index: 1, kind: input, shape index: {}]
  %s2 = inlined_call_operand.hbm [shape: f32[1,1024], index: 2, kind: output, shape index: {}]
  %s3 = sld [smem:[#allocation0]]
  $region26: #{tpu_custom_call.1} parent=0
    _
  %s5 = ssub.s32 1, %s3
  %s6 = scalar_select 0, %s5, %s3
  $region1: #{tpu_custom_call.1} parent=0
    #allocation2 [shape = 'u8[512]{0}', space=smem, size = 0x200, scoped, tag = 'input window, operand 0, single buffered']
    #allocation3 [shape = 's32[1]{0}', space=sflag, size = 0x4, scoped, tag = 'scoped memory for tpu_custom_call.1']
    #allocation4 [shape = 's32[1]{0}', space=sflag, size = 0x4, scoped, tag = 'scoped memory for tpu_custom_call.1']
    #allocation5 [shape = 's32[1]{0}', space=sflag, size = 0x4, scoped, tag = 'scoped memory for tpu_custom_call.1']
    #allocation6 [shape = 'u8[4096]{0}', space=vmem, size = 0x1000, scoped, tag = 'input window, operand 1, single buffered']
    #allocation7 [shape = 'u8[4096]{0}', space=vmem, size = 0x1000, scoped, tag = 'output window, operand 0, single buffered']
    %7 = vsyncpa [#allocation5], 0
    %8 = vsyncpa [#allocation3], 0
    %9 = vsyncpa [#allocation4], 0
    // Predicated region
    $region2: #{tpu_custom_call.1} parent=1 // pred_check
      _
    $region3: #{tpu_custom_call.1} parent=1 // pred_check_branch
      %11 = sbr.rel (0) target = $region5
    $region4: #{tpu_custom_call.1} parent=1 // pred_region
      %s13 = ssub.s32 16, 16
      %14 = vsyncadd [#allocation5], %s13
      %17 = dma.hbm_to_smem %s0, 16, [#allocation2], [#allocation5]
    $region5: #{tpu_custom_call.1} parent=1 // pred_fallthru
      _
    // Predicated region
    $region6: #{tpu_custom_call.1} parent=1 // pred_check
      _
    $region7: #{tpu_custom_call.1} parent=1 // pred_check_branch
      %19 = sbr.rel (0) target = $region9
    $region8: #{tpu_custom_call.1} parent=1 // pred_region
      %s21 = ssub.s32 128, 128
      %22 = vsyncadd [#allocation3], %s21
      %s24 = sshll.u32 [#allocation6], 4
      %s25 = int_to_ptr.vmem [resolvable:$true] %s24
      %27 = dma.hbm_to_vmem [thread:$0]  %s1, 128, %s25, [#allocation3]
    $region9: #{tpu_custom_call.1} parent=1 // pred_fallthru
      _
    // Predicated region
    $region10: #{tpu_custom_call.1} parent=1 // pred_check
      _
    $region11: #{tpu_custom_call.1} parent=1 // pred_check_branch
      %29 = sbr.rel (0) target = $region13
    $region12: #{tpu_custom_call.1} parent=1 // pred_region
      %30 = dma.done [#allocation5], 16
    $region13: #{tpu_custom_call.1} parent=1 // pred_fallthru
      _
    // Predicated region
    $region14: #{tpu_custom_call.1} parent=1 // pred_check
      _
    $region15: #{tpu_custom_call.1} parent=1 // pred_check_branch
      %32 = sbr.rel (0) target = $region17
    $region16: #{tpu_custom_call.1} parent=1 // pred_region
      %33 = dma.done [#allocation3], 128
    $region17: #{tpu_custom_call.1} parent=1 // pred_fallthru
      _
    %34 = sfence
    %s35 = sld [smem:[#allocation2]]
    %s36 = sld [smem:[#allocation2 + $0x1]]
    %v37 = vld [vmem:[#allocation6] sm:$0xff]
    %v38 = vstv %s35
    %v39 = vmul.f32 %v38, %v37
    %v40 = vstv %s36
    %v41 = vadd.f32 %v39, %v40
    %42 = vst [vmem:[#allocation7] sm:$0xff] %v41
    // Predicated region
    $region18: #{tpu_custom_call.1} parent=1 // pred_check
      _
    $region19: #{tpu_custom_call.1} parent=1 // pred_check_branch
      %44 = sbr.rel (0) target = $region21
    $region20: #{tpu_custom_call.1} parent=1 // pred_region
      %s46 = ssub.s32 128, 128
      %47 = vsyncadd [#allocation4], %s46
      %s49 = sshll.u32 [#allocation7], 4
      %s50 = int_to_ptr.vmem [resolvable:$true] %s49
      %52 = dma.vmem_to_hbm [thread:$0]  %s50, 128, %s2, [#allocation4]
    $region21: #{tpu_custom_call.1} parent=1 // pred_fallthru
      _
    // Predicated region
    $region22: #{tpu_custom_call.1} parent=1 // pred_check
      _
    $region23: #{tpu_custom_call.1} parent=1 // pred_check_branch
      %54 = sbr.rel (0) target = $region25
    $region24: #{tpu_custom_call.1} parent=1 // pred_region
      %55 = dma.done [#allocation4], 128
    $region25: #{tpu_custom_call.1} parent=1 // pred_fallthru
      _
    %56 = vsyncpa [#allocation3], 1
    %57 = vsyncpa [#allocation4], 1
    %58 = vsyncpa [#allocation5], 1

</llo_original>
